<compile_context>
chip_gen: v5e
topology: v5e:2x2
jax: 0.10.0
libtpu: 0.0.40
codegen_flags: <defaults>
</compile_context>

<pallas_src>
import jax
import jax.numpy as jnp
from jax.experimental import pallas as pl
from jax.experimental.pallas import tpu as pltpu

HIDDEN = 16  # fixed by the module definition (nn.Linear(input_dim, 16))


def _round_up(x, m):
    return ((x + m - 1) // m) * m


def _mlp_kernel(x_ref, w1_ref, b1_ref, w2_ref, b2_ref, o_ref):
    # fc1 + bias + ReLU (f32 accumulation; hidden is lane-dense after padding to 128)
    h = jnp.dot(x_ref[...], w1_ref[...], preferred_element_type=jnp.float32)
    h = jnp.maximum(h + b1_ref[...], 0.0)
    # fc2 + bias; keep h in f32
    y = jnp.dot(h, w2_ref[...], preferred_element_type=jnp.float32)
    o_ref[...] = (y + b2_ref[...]).astype(o_ref.dtype)


def prepare_params(w1, b1, w2, b2):
    """Pad parameters ONCE (not per forward call).

    hidden -> 128 lanes (lane-dense fc1/bias/ReLU; zero pads + ReLU(0)=0 are exact).
    d_out  -> rounded up to 128 only when it is already >= 128; a small d_out is
              left unpadded so output HBM writeback stays minimal.
    Returns ((w1_p, b1_p, w2_p, b2_p), d_out).
    """
    d_in, hidden = w1.shape
    d_out = w2.shape[1]
    assert w2.shape[0] == hidden and b1.shape == (hidden,) and b2.shape == (d_out,)

    h_pad = _round_up(hidden, 128)
    d_out_pad = d_out if d_out < 128 else _round_up(d_out, 128)

    w1_p = jnp.pad(w1, ((0, 0), (0, h_pad - hidden)))
    b1_p = jnp.pad(b1, (0, h_pad - hidden)).reshape(1, h_pad)
    w2_p = jnp.pad(w2, ((0, h_pad - hidden), (0, d_out_pad - d_out)))
    b2_p = jnp.pad(b2, (0, d_out_pad - d_out)).reshape(1, d_out_pad)
    return (w1_p, b1_p, w2_p, b2_p), d_out


def _vmem_cap_bytes():
    """~80% of this generation's physical VMEM (v7x: 64 MiB -> ~51; v5e/v6e: ~102)."""
    try:
        info = pltpu.get_tpu_info()
        cap = int(getattr(info, "vmem_capacity_bytes", 64 << 20))
    except Exception:
        cap = 64 << 20  # conservative fallback (v7x per-TC VMEM)
    return max(16 << 20, int(cap * 0.8))


def _choose_tm(B, d_in, h_pad, d_out_pad, x_itemsize, w_itemsize, cap):
    # Resident bytes: weights + biases (constant index_map, loaded once).
    resident = (d_in * h_pad + h_pad + h_pad * d_out_pad + d_out_pad) * w_itemsize
    # Per-row streamed bytes: double-buffered x + out blocks plus f32 fc1/fc2 temps.
    per_row = (2 * d_in + 2 * d_out_pad) * x_itemsize + (h_pad + d_out_pad) * 4
    budget = max(cap - resident, 1 << 20)
    tm = min(2048, max(8, (budget // per_row) // 8 * 8))
    # Prefer >= 2 grid steps for moderate B (v7x: both TensorCores get work).
    if 16 <= B <= tm:
        tm = min(tm, _round_up(pl.cdiv(B, 2), 8))
    tm = min(tm, _round_up(B, 8))
    return max(8, tm), resident, per_row


def state_transform_mlp(x, params, d_out, *, tm=None):
    """x: (B, input_dim); params from prepare_params(). Returns (B, d_out) in x.dtype."""
    w1_p, b1_p, w2_p, b2_p = params
    B, d_in = x.shape
    h_pad = w1_p.shape[1]
    d_out_pad = w2_p.shape[1]

    cap = _vmem_cap_bytes()
    auto_tm, resident, per_row = _choose_tm(
        B, d_in, h_pad, d_out_pad, x.dtype.itemsize, w1_p.dtype.itemsize, cap)
    if tm is None:
        tm = auto_tm
    tm = max(8, _round_up(min(tm, _round_up(B, 8)), 8))

    grid = (pl.cdiv(B, tm),)  # ragged last block handled by Pallas; no batch padding
    vmem_limit = int(min(cap, max(2 * (resident + per_row * tm), 16 << 20)))

    flops = 2 * B * (d_in * h_pad + h_pad * d_out_pad)
    bytes_accessed = B * (d_in + d_out_pad) * x.dtype.itemsize + resident

    out = pl.pallas_call(
        _mlp_kernel,
        out_shape=jax.ShapeDtypeStruct((B, d_out_pad), x.dtype),
        grid_spec=pl.GridSpec(
            grid=grid,
            in_specs=[
                pl.BlockSpec((tm, d_in), lambda i: (i, 0)),           # streamed x
                pl.BlockSpec((d_in, h_pad), lambda i: (0, 0)),        # resident w1
                pl.BlockSpec((1, h_pad), lambda i: (0, 0)),           # resident b1
                pl.BlockSpec((h_pad, d_out_pad), lambda i: (0, 0)),   # resident w2
                pl.BlockSpec((1, d_out_pad), lambda i: (0, 0)),       # resident b2
            ],
            out_specs=pl.BlockSpec((tm, d_out_pad), lambda i: (i, 0)),
        ),
        compiler_params=pltpu.CompilerParams(
            dimension_semantics=("parallel",),
            vmem_limit_bytes=vmem_limit,
        ),
        cost_estimate=pl.CostEstimate(
            flops=flops, transcendentals=0, bytes_accessed=bytes_accessed),
    )(x, w1_p, b1_p, w2_p, b2_p)

    # No lane slice when d_out < 128 (unpadded); only trim when d_out was rounded up.
    return out if d_out_pad == d_out else out[:, :d_out]


def init_params(key, input_dim, output_dim):
    """Deterministic init mirroring nn.Linear's U(-1/sqrt(fan_in), 1/sqrt(fan_in))."""
    k1, k2, k3, k4 = jax.random.split(key, 4)
    bound1 = 1.0 / jnp.sqrt(jnp.float32(input_dim))
    bound2 = 1.0 / jnp.sqrt(jnp.float32(HIDDEN))
    w1 = jax.random.uniform(k1, (input_dim, HIDDEN), jnp.float32, -bound1, bound1)
    b1 = jax.random.uniform(k2, (HIDDEN,), jnp.float32, -bound1, bound1)
    w2 = jax.random.uniform(k3, (HIDDEN, output_dim), jnp.float32, -bound2, bound2)
    b2 = jax.random.uniform(k4, (output_dim,), jnp.float32, -bound2, bound2)
    return w1, b1, w2, b2


if __name__ == "__main__":
    key = jax.random.PRNGKey(0)
    batch, input_dim, output_dim = 24, 32, 8

    kx, kp = jax.random.split(key)
    x = jax.random.normal(kx, (batch, input_dim), jnp.float32)
    w1, b1, w2, b2 = init_params(kp, input_dim, output_dim)
    params, d_out = prepare_params(w1, b1, w2, b2)  # one-time weight/bias padding

    # Auto tm -> 16 here: exercises the 2-step grid with a ragged (masked) last block.
    out = state_transform_mlp(x, params, d_out)
    jax.block_until_ready(out)

    # reference check in plain JAX
    ref = jnp.maximum(x @ w1 + b1, 0.0) @ w2 + b2
    assert out.shape == (batch, output_dim)
    assert jnp.allclose(out, ref, atol=1e-5, rtol=1e-5)

    # also exercise the single-tile path (tm clamped to round_up(B, 8) = 24)
    out2 = state_transform_mlp(x, params, d_out, tm=32)
    jax.block_until_ready(out2)
    assert jnp.allclose(out2, ref, atol=1e-5, rtol=1e-5)

    print("KERNEL_OK")
</pallas_src>

<mosaic_0001>
module attributes {stable_mosaic.version = 11 : i64} {
  func.func @_mlp_kernel(%arg0: i32, %arg1: memref<16x32xf32, #tpu.memory_space<vmem>>, %arg2: memref<32x128xf32, #tpu.memory_space<vmem>>, %arg3: memref<1x128xf32, #tpu.memory_space<vmem>>, %arg4: memref<128x8xf32, #tpu.memory_space<vmem>>, %arg5: memref<1x8xf32, #tpu.memory_space<vmem>>, %arg6: memref<16x8xf32, #tpu.memory_space<vmem>>) attributes {dimension_semantics = [#tpu.dimension_semantics<parallel>], iteration_bounds = array<i64: 2>, scalar_prefetch = 0 : i64, scratch_operands = 0 : i64, tpu.core_type = #tpu.core_type<tc>, window_params = [{transform_indices = @transform_0, window_bounds = array<i64: 16, 32>}, {pipeline_mode = #tpu.pipeline_mode<synchronous>, transform_indices = @transform_1, window_bounds = array<i64: 32, 128>}, {pipeline_mode = #tpu.pipeline_mode<synchronous>, transform_indices = @transform_2, window_bounds = array<i64: 1, 128>}, {pipeline_mode = #tpu.pipeline_mode<synchronous>, transform_indices = @transform_3, window_bounds = array<i64: 128, 8>}, {pipeline_mode = #tpu.pipeline_mode<synchronous>, transform_indices = @transform_4, window_bounds = array<i64: 1, 8>}, {transform_indices = @transform_5, window_bounds = array<i64: 16, 8>}]} {
    %c0 = arith.constant 0 : index
    %c0_0 = arith.constant 0 : index
    %0 = vector.load %arg1[%c0, %c0_0] : memref<16x32xf32, #tpu.memory_space<vmem>>, vector<16x32xf32>
    %c0_1 = arith.constant 0 : index
    %c0_2 = arith.constant 0 : index
    %1 = vector.load %arg2[%c0_1, %c0_2] : memref<32x128xf32, #tpu.memory_space<vmem>>, vector<32x128xf32>
    %cst = arith.constant dense<0.000000e+00> : vector<16x128xf32>
    %2 = tpu.matmul %0, %1, %cst {dimension_numbers = #tpu.dot_dimension_numbers<[1], [0], [0], [1], [0, 0, 1, 1], [], []>} : vector<16x32xf32>, vector<32x128xf32>, vector<16x128xf32> -> vector<16x128xf32>
    %c0_3 = arith.constant 0 : index
    %c0_4 = arith.constant 0 : index
    %3 = vector.load %arg3[%c0_3, %c0_4] : memref<1x128xf32, #tpu.memory_space<vmem>>, vector<1x128xf32>
    %4 = vector.broadcast %3 : vector<1x128xf32> to vector<16x128xf32>
    %5 = arith.addf %2, %4 : vector<16x128xf32>
    %cst_5 = arith.constant 0.000000e+00 : f32
    %6 = vector.broadcast %cst_5 : f32 to vector<16x128xf32>
    %7 = arith.maximumf %5, %6 : vector<16x128xf32>
    %c0_6 = arith.constant 0 : index
    %c0_7 = arith.constant 0 : index
    %8 = vector.load %arg4[%c0_6, %c0_7] : memref<128x8xf32, #tpu.memory_space<vmem>>, vector<128x8xf32>
    %cst_8 = arith.constant dense<0.000000e+00> : vector<16x8xf32>
    %9 = tpu.matmul %7, %8, %cst_8 {dimension_numbers = #tpu.dot_dimension_numbers<[1], [0], [0], [1], [0, 0, 1, 1], [], []>} : vector<16x128xf32>, vector<128x8xf32>, vector<16x8xf32> -> vector<16x8xf32>
    %c0_9 = arith.constant 0 : index
    %c0_10 = arith.constant 0 : index
    %10 = vector.load %arg5[%c0_9, %c0_10] : memref<1x8xf32, #tpu.memory_space<vmem>>, vector<1x8xf32>
    %11 = vector.broadcast %10 : vector<1x8xf32> to vector<16x8xf32>
    %12 = arith.addf %9, %11 : vector<16x8xf32>
    %c0_11 = arith.constant 0 : index
    %c0_12 = arith.constant 0 : index
    %13 = vector.load %arg6[%c0_11, %c0_12] : memref<16x8xf32, #tpu.memory_space<vmem>>, vector<16x8xf32>
    tpu.vector_store %arg6[%c0_11, %c0_12], %12 {strides = array<i32>} : memref<16x8xf32, #tpu.memory_space<vmem>>, vector<16x8xf32>,
    return
  }
  func.func @transform_0(%arg0: i32) -> (i32, i32) {
    %c0_i32 = arith.constant 0 : i32
    %c0_i32_0 = arith.constant 0 : i32
    return %arg0, %c0_i32 : i32, i32
  }
  func.func @transform_1(%arg0: i32) -> (i32, i32) {
    %c0_i32 = arith.constant 0 : i32
    %c0_i32_0 = arith.constant 0 : i32
    %c0_i32_1 = arith.constant 0 : i32
    return %c0_i32, %c0_i32_0 : i32, i32
  }
  func.func @transform_2(%arg0: i32) -> (i32, i32) {
    %c0_i32 = arith.constant 0 : i32
    %c0_i32_0 = arith.constant 0 : i32
    %c0_i32_1 = arith.constant 0 : i32
    return %c0_i32, %c0_i32_0 : i32, i32
  }
  func.func @transform_3(%arg0: i32) -> (i32, i32) {
    %c0_i32 = arith.constant 0 : i32
    %c0_i32_0 = arith.constant 0 : i32
    %c0_i32_1 = arith.constant 0 : i32
    return %c0_i32, %c0_i32_0 : i32, i32
  }
  func.func @transform_4(%arg0: i32) -> (i32, i32) {
    %c0_i32 = arith.constant 0 : i32
    %c0_i32_0 = arith.constant 0 : i32
    %c0_i32_1 = arith.constant 0 : i32
    return %c0_i32, %c0_i32_0 : i32, i32
  }
  func.func @transform_5(%arg0: i32) -> (i32, i32) {
    %c0_i32 = arith.constant 0 : i32
    %c0_i32_0 = arith.constant 0 : i32
    return %arg0, %c0_i32 : i32, i32
  }
}

</mosaic_0001>

<llo_original>
// kernel: tpu_custom_call.1
$region0: #{tpu_custom_call.1}
  #allocation0 [shape = 'u32[]', space=smem, size = 0x4, offset = 0x4, fixed_abs, tag = 'smem constant byte address 0x4 - core index']
  #allocation1 [shape = 'u32[72,128]{1,0:T(1,128)}', space=vmem, size = 0x9000, scoped, tag = 'internal scratch']
  %s0 = inlined_call_operand.vmem [shape: f32[24,32], index: 0, kind: input, shape index: {}]
  %s1 = inlined_call_operand.vmem [shape: f32[32,128], index: 1, kind: input, shape index: {}]
  %s2 = inlined_call_operand.vmem [shape: f32[1,128], index: 2, kind: input, shape index: {}]
  %s3 = inlined_call_operand.vmem [shape: f32[128,8], index: 3, kind: input, shape index: {}]
  %s4 = inlined_call_operand.vmem [shape: f32[1,8], index: 4, kind: input, shape index: {}]
  %s5 = inlined_call_operand.vmem [shape: f32[24,8], index: 5, kind: output, shape index: {}]
  %s6 = sld [smem:[#allocation0]]
  $region101: #{tpu_custom_call.1} parent=0
    _
  %s8 = ssub.s32 1, %s6
  %s9 = scalar_select 0, %s8, %s6
  $region1: #{tpu_custom_call.1} parent=0
    #allocation2 [shape = 'u8[16384]{0}', space=vmem, size = 0x4000, scoped, tag = 'output window, operand 0']
    loop: start=0, step=1, limit=4
    $region2: #{tpu_custom_call.1} parent=1 // loop_pre_header
      _
    $region3: #{tpu_custom_call.1} parent=1 // loop_header
      %s11 = sphi 0, %s15
      %p12 = scmp.ge.s32.totalorder %s11, 4
      %s21 = sphi 0, %s23
      %s24 = sphi 0, %s21
      %s25 = sphi 0, %s24
      %s41 = sphi 0, %s25
      %s45 = sphi 0, %s45
      %s47 = sphi 0, %s45
      %s48 = sphi 0, %s47
      %s62 = sphi 0, %s48
      %s66 = sphi 0, %s66
      %s68 = sphi 0, %s66
      %s69 = sphi 0, %s68
      %s83 = sphi 0, %s69
      %s87 = sphi 0, %s87
      %s89 = sphi 0, %s87
      %s90 = sphi 0, %s89
      %s104 = sphi 0, %s90
      %s108 = sphi 0, %s108
      %s110 = sphi 0, %s108
      %s111 = sphi 0, %s110
      %s125 = sphi 0, %s111
      %s131 = sphi 0, %s133
      %s134 = sphi 0, %s131
      %s135 = sphi 0, %s134
      %s151 = sphi 0, %s135
    $region4: #{tpu_custom_call.1} parent=1 // loop_header_branch
      %14 = sbr.rel (%p12) target = $region8
    $region5: #{tpu_custom_call.1} parent=1 // loop_body
      %s16 = ssub.s32 %s11, 1
      %s17 = ssub.s32 %s11, 2
      %s18 = sadd.s32 %s11, 1
      %s19 = ssub.s32 %s11, %s18
      %p20 = scmp.eq.s32.totalorder %s19, 0
      %s22 = sadd.s32 %s21, 1
      %s23 = scalar_select %p20, %s21, %s22
      %p26 = pneg %p20
      %p27 = scmp.eq.s32.totalorder %s11, 1
      %p28 = por %p26, %p27
      %p29 = scmp.ne.s32.totalorder %s21, %s24
      %p30 = scmp.eq.s32.totalorder %s11, 0
      %p31 = por %p29, %p30
      %p32 = scmp.ne.s32.totalorder %s21, %s24
      %p33 = scmp.eq.s32.totalorder %s16, 1
      %p34 = por %p32, %p33
      %p35 = scmp.ne.s32.totalorder %s24, %s25
      %p36 = scmp.eq.s32.totalorder %s16, 0
      %p37 = por %p35, %p36
      %p38 = scmp.ne.s32.totalorder %s24, %s25
      %p39 = scmp.eq.s32.totalorder %s17, 1
      %p40 = por %p38, %p39
      %p42 = scmp.ne.s32.totalorder %s25, %s41
      %p43 = scmp.eq.s32.totalorder %s17, 0
      %p44 = por %p42, %p43
      %s46 = sadd.s32 %s45, 1
      %p49 = scmp.eq.s32.totalorder %s11, 1
      %p50 = scmp.ne.s32.totalorder %s45, %s47
      %p51 = scmp.eq.s32.totalorder %s11, 0
      %p52 = por %p50, %p51
      %p53 = scmp.ne.s32.totalorder %s45, %s47
      %p54 = scmp.eq.s32.totalorder %s16, 1
      %p55 = por %p53, %p54
      %p56 = scmp.ne.s32.totalorder %s47, %s48
      %p57 = scmp.eq.s32.totalorder %s16, 0
      %p58 = por %p56, %p57
      %p59 = scmp.ne.s32.totalorder %s47, %s48
      %p60 = scmp.eq.s32.totalorder %s17, 1
      %p61 = por %p59, %p60
      %p63 = scmp.ne.s32.totalorder %s48, %s62
      %p64 = scmp.eq.s32.totalorder %s17, 0
      %p65 = por %p63, %p64
      %s67 = sadd.s32 %s66, 1
      %p70 = scmp.eq.s32.totalorder %s11, 1
      %p71 = scmp.ne.s32.totalorder %s66, %s68
      %p72 = scmp.eq.s32.totalorder %s11, 0
      %p73 = por %p71, %p72
      %p74 = scmp.ne.s32.totalorder %s66, %s68
      %p75 = scmp.eq.s32.totalorder %s16, 1
      %p76 = por %p74, %p75
      %p77 = scmp.ne.s32.totalorder %s68, %s69
      %p78 = scmp.eq.s32.totalorder %s16, 0
      %p79 = por %p77, %p78
      %p80 = scmp.ne.s32.totalorder %s68, %s69
      %p81 = scmp.eq.s32.totalorder %s17, 1
      %p82 = por %p80, %p81
      %p84 = scmp.ne.s32.totalorder %s69, %s83
      %p85 = scmp.eq.s32.totalorder %s17, 0
      %p86 = por %p84, %p85
      %s88 = sadd.s32 %s87, 1
      %p91 = scmp.eq.s32.totalorder %s11, 1
      %p92 = scmp.ne.s32.totalorder %s87, %s89
      %p93 = scmp.eq.s32.totalorder %s11, 0
      %p94 = por %p92, %p93
      %p95 = scmp.ne.s32.totalorder %s87, %s89
      %p96 = scmp.eq.s32.totalorder %s16, 1
      %p97 = por %p95, %p96
      %p98 = scmp.ne.s32.totalorder %s89, %s90
      %p99 = scmp.eq.s32.totalorder %s16, 0
      %p100 = por %p98, %p99
      %p101 = scmp.ne.s32.totalorder %s89, %s90
      %p102 = scmp.eq.s32.totalorder %s17, 1
      %p103 = por %p101, %p102
      %p105 = scmp.ne.s32.totalorder %s90, %s104
      %p106 = scmp.eq.s32.totalorder %s17, 0
      %p107 = por %p105, %p106
      %s109 = sadd.s32 %s108, 1
      %p112 = scmp.eq.s32.totalorder %s11, 1
      %p113 = scmp.ne.s32.totalorder %s108, %s110
      %p114 = scmp.eq.s32.totalorder %s11, 0
      %p115 = por %p113, %p114
      %p116 = scmp.ne.s32.totalorder %s108, %s110
      %p117 = scmp.eq.s32.totalorder %s16, 1
      %p118 = por %p116, %p117
      %p119 = scmp.ne.s32.totalorder %s110, %s111
      %p120 = scmp.eq.s32.totalorder %s16, 0
      %p121 = por %p119, %p120
      %p122 = scmp.ne.s32.totalorder %s110, %s111
      %p123 = scmp.eq.s32.totalorder %s17, 1
      %p124 = por %p122, %p123
      %p126 = scmp.ne.s32.totalorder %s111, %s125
      %p127 = scmp.eq.s32.totalorder %s17, 0
      %p128 = por %p126, %p127
      %s129 = ssub.s32 %s11, %s18
      %p130 = scmp.eq.s32.totalorder %s129, 0
      %s132 = sadd.s32 %s131, 1
      %s133 = scalar_select %p130, %s131, %s132
      %p136 = pneg %p130
      %p137 = scmp.eq.s32.totalorder %s11, 1
      %p138 = por %p136, %p137
      %p139 = scmp.ne.s32.totalorder %s131, %s134
      %p140 = scmp.eq.s32.totalorder %s11, 0
      %p141 = por %p139, %p140
      %p142 = scmp.ne.s32.totalorder %s131, %s134
      %p143 = scmp.eq.s32.totalorder %s16, 1
      %p144 = por %p142, %p143
      %p145 = scmp.ne.s32.totalorder %s134, %s135
      %p146 = scmp.eq.s32.totalorder %s16, 0
      %p147 = por %p145, %p146
      %p148 = scmp.ne.s32.totalorder %s134, %s135
      %p149 = scmp.eq.s32.totalorder %s17, 1
      %p150 = por %p148, %p149
      %p152 = scmp.ne.s32.totalorder %s135, %s151
      %p153 = scmp.eq.s32.totalorder %s17, 0
      %p154 = por %p152, %p153
      %p155 = scmp.le.s32.totalorder 1, %s11
      %p156 = scmp.lt.s32.totalorder %s11, 3
      %p157 = pnand %p155, %p156
      %p158 = pneg %p157
      // Predicated region
      $region9: #{tpu_custom_call.1} parent=5 // pred_check
        _
      $region10: #{tpu_custom_call.1} parent=5 // pred_check_branch
        %160 = sbr.rel (%p157) target = $region12
      $region11: #{tpu_custom_call.1} parent=5 // pred_region
        %s161 = ssub.s32 %s11, 1
        // Predicated region
        $region13: #{tpu_custom_call.1} parent=11 // pred_check
          %p162 = pneg %p58
        $region14: #{tpu_custom_call.1} parent=11 // pred_check_branch
          %164 = sbr.rel (%p162) target = $region16
        $region15: #{tpu_custom_call.1} parent=11 // pred_region
          _
        $region16: #{tpu_custom_call.1} parent=11 // pred_fallthru
          _
        // Predicated region
        $region17: #{tpu_custom_call.1} parent=11 // pred_check
          %p165 = pneg %p79
        $region18: #{tpu_custom_call.1} parent=11 // pred_check_branch
          %167 = sbr.rel (%p165) target = $region20
        $region19: #{tpu_custom_call.1} parent=11 // pred_region
          _
        $region20: #{tpu_custom_call.1} parent=11 // pred_fallthru
          _
        // Predicated region
        $region21: #{tpu_custom_call.1} parent=11 // pred_check
          %p168 = pneg %p100
        $region22: #{tpu_custom_call.1} parent=11 // pred_check_branch
          %170 = sbr.rel (%p168) target = $region24
        $region23: #{tpu_custom_call.1} parent=11 // pred_region
          _
        $region24: #{tpu_custom_call.1} parent=11 // pred_fallthru
          _
        // Predicated region
        $region25: #{tpu_custom_call.1} parent=11 // pred_check
          %p171 = pneg %p121
        $region26: #{tpu_custom_call.1} parent=11 // pred_check_branch
          %173 = sbr.rel (%p171) target = $region28
        $region27: #{tpu_custom_call.1} parent=11 // pred_region
          _
        $region28: #{tpu_custom_call.1} parent=11 // pred_fallthru
          _
      $region12: #{tpu_custom_call.1} parent=5 // pred_fallthru
        _
      %p174 = scmp.lt.s32.totalorder %s11, 2
      // Predicated region
      $region29: #{tpu_custom_call.1} parent=5 // pred_check
        %p175 = pneg %p174
      $region30: #{tpu_custom_call.1} parent=5 // pred_check_branch
        %177 = sbr.rel (%p175) target = $region32
      $region31: #{tpu_custom_call.1} parent=5 // pred_region
        // Predicated region
        $region33: #{tpu_custom_call.1} parent=31 // pred_check
          %p178 = pneg %p31
        $region34: #{tpu_custom_call.1} parent=31 // pred_check_branch
          %180 = sbr.rel (%p178) target = $region36
        $region35: #{tpu_custom_call.1} parent=31 // pred_region
          %s181 = smul.u32 2, %s11
          %s182 = ssub.s32 3, %s181
          %p183 = scmp.lt.s32.totalorder %s182, 2
          %s184 = scalar_select %p183, %s182, 2
          %s185 = smul.u32 8, %s184
          %p186 = scmp.lt.s32.totalorder %s181, 2
          %s187 = scalar_select %p186, %s181, 2
          %s188 = smul.addr %s187, 8
          %s189 = scalar_lea.vmem %s0, %s188
          %s190 = smul.u32 2, %s11
          %s191 = ssub.s32 3, %s190
          %p192 = scmp.lt.s32.totalorder %s191, 2
          %s193 = scalar_select %p192, %s191, 2
          %s194 = smul.u32 8, %s193
        $region36: #{tpu_custom_call.1} parent=31 // pred_fallthru
          _
      $region32: #{tpu_custom_call.1} parent=5 // pred_fallthru
        _
      %p195 = scmp.le.s32.totalorder 1, %s11
      %p196 = scmp.lt.s32.totalorder %s11, 3
      %p197 = pnand %p195, %p196
      %p198 = pneg %p197
      // Predicated region
      $region37: #{tpu_custom_call.1} parent=5 // pred_check
        _
      $region38: #{tpu_custom_call.1} parent=5 // pred_check_branch
        %200 = sbr.rel (%p197) target = $region40
      $region39: #{tpu_custom_call.1} parent=5 // pred_region
        %s201 = ssub.s32 %s11, 1
        %s202 = smul.u32 2, %s16
        %s203 = ssub.s32 3, %s202
        %p204 = scmp.lt.s32.totalorder %s203, 2
        %s205 = scalar_select %p204, %s203, 2
        %s206 = smul.u32 8, %s205
        %p207 = scmp.lt.s32.totalorder %s202, 2
        %s208 = scalar_select %p207, %s202, 2
        %s209 = smul.addr %s208, 8
        %s210 = scalar_lea.vmem %s0, %s209
        %p211 = pneg %p37
        %p212 = pneg %p34
        %p213 = pneg %p58
        %p214 = pneg %p55
        %p215 = pneg %p79
        %p216 = pneg %p76
        %p217 = pneg %p100
        %p218 = pneg %p97
        %p219 = pneg %p121
        %p220 = pneg %p118
        %p221 = pneg %p147
        %p222 = pneg %p144
        %s223 = sand.u32 %s134, 1
        %s224 = sand.u32 %s134, 1
        %s225 = smul.addr %s224, 16
        %s226 = scalar_lea.vmem [#allocation2], %s225
        %s227 = smul.u32 2, %s16
        %s228 = ssub.s32 3, %s227
        %p229 = scmp.lt.s32.totalorder %s228, 2
        %s230 = scalar_select %p229, %s228, 2
        %s231 = smul.u32 8, %s230
        %p232 = scmp.lt.s32.totalorder %s227, 2
        %s233 = scalar_select %p232, %s227, 2
        %s234 = smul.addr %s233, 8
        %s235 = scalar_lea.vmem %s0, %s234
        %s236 = smul.u32 2, %s16
        %s237 = ssub.s32 3, %s236
        %p238 = scmp.lt.s32.totalorder %s237, 2
        %s239 = scalar_select %p238, %s237, 2
        %s240 = smul.u32 8, %s239
        %s241 = smul.u32 2, %s16
        %s242 = ssub.s32 3, %s241
        %p243 = scmp.lt.s32.totalorder %s242, 2
        %s244 = scalar_select %p243, %s242, 2
        %s245 = smul.u32 8, %s244
        %v246 = vld [vmem:[%s235] sm:$0xff]
        %v247 = vld [vmem:[%s235 + $0x8] sm:$0xff]
        %v248 = vld [vmem:[%s1] sm:$0xff]
        %v249 = vld [vmem:[%s1 + $0x8] sm:$0xff]
        %v250 = vld [vmem:[%s1 + $0x10] sm:$0xff]
        %v251 = vld [vmem:[%s1 + $0x18] sm:$0xff]
        %v252 = vld [vmem:[%s2] sm:$0x1]
        %v254 = vperm.slane %v252, 0
        %vm256 = vcmask 261120
        %v258 = vsel %vm256, %v246, 0
        %v261 = vsel %vm256, %v247, 0
        %263 = vmatpush.msra.mxu0 0.0
        %264 = vmatpush.msra.mxu0 0.0
        %265 = vmatpush.msra.mxu0 0.0
        %266 = vmatpush.msra.mxu0 0.0
        %267 = vmatpush.msra.mxu0 0.0
        %268 = vmatpush.msra.mxu0 0.0
        %269 = vmatpush.msra.mxu0 0.0
        %270 = vmatpush.msra.mxu0 0.0
        %271 = vmatpush.msra.mxu0 0.0
        %272 = vmatpush.msra.mxu0 0.0
        %273 = vmatpush.msra.mxu0 0.0
        %274 = vmatpush.msra.mxu0 0.0
        %275 = vmatpush.msra.mxu0 %v251
        %276 = vmatpush.msra.mxu0 %v250
        %277 = vmatpush.msra.mxu0 %v249
        %278 = vmatpush.msra.mxu0 %v248
        %279 = vmatmul.f32.gmra.mxu0 %v258
        %v280 = vpop.f32.mrf.mxu0
        %v281 = vadd.f32 %v254, %v280
        %282 = vmatmul.f32.gmra.mxu0 %v261
        %v283 = vpop.f32.mrf.mxu0
        %v284 = vadd.f32 %v254, %v283
        %285 = vdwg.mxu0
        %v286 = vmax.f32 %v281, 0.0
        %v287 = vmax.f32 %v284, 0.0
        %v288 = vld [vmem:[%s3] sm:$0xff]
        %v289 = vld [vmem:[%s3 + $0x8] sm:$0xff]
        %v290 = vld [vmem:[%s3 + $0x10] sm:$0xff]
        %v291 = vld [vmem:[%s3 + $0x18] sm:$0xff]
        %v292 = vld [vmem:[%s3 + $0x20] sm:$0xff]
        %v293 = vld [vmem:[%s3 + $0x28] sm:$0xff]
        %v294 = vld [vmem:[%s3 + $0x30] sm:$0xff]
        %v295 = vld [vmem:[%s3 + $0x38] sm:$0xff]
        %v296 = vld [vmem:[%s3 + $0x40] sm:$0xff]
        %v297 = vld [vmem:[%s3 + $0x48] sm:$0xff]
        %v298 = vld [vmem:[%s3 + $0x50] sm:$0xff]
        %v299 = vld [vmem:[%s3 + $0x58] sm:$0xff]
        %v300 = vld [vmem:[%s3 + $0x60] sm:$0xff]
        %v301 = vld [vmem:[%s3 + $0x68] sm:$0xff]
        %v302 = vld [vmem:[%s3 + $0x70] sm:$0xff]
        %v303 = vld [vmem:[%s3 + $0x78] sm:$0xff]
        %v304 = vld [vmem:[%s4] sm:$0x1]
        %v306 = vperm.slane %v304, 0
        %308 = vmatpush.msra.mxu0 %v303
        %309 = vmatpush.msra.mxu0 %v302
        %310 = vmatpush.msra.mxu0 %v301
        %311 = vmatpush.msra.mxu0 %v300
        %312 = vmatpush.msra.mxu0 %v299
        %313 = vmatpush.msra.mxu0 %v298
        %314 = vmatpush.msra.mxu0 %v297
        %315 = vmatpush.msra.mxu0 %v296
        %316 = vmatpush.msra.mxu0 %v295
        %317 = vmatpush.msra.mxu0 %v294
        %318 = vmatpush.msra.mxu0 %v293
        %319 = vmatpush.msra.mxu0 %v292
        %320 = vmatpush.msra.mxu0 %v291
        %321 = vmatpush.msra.mxu0 %v290
        %322 = vmatpush.msra.mxu0 %v289
        %323 = vmatpush.msra.mxu0 %v288
        %324 = vmatmul.f32.gmra.mxu0 %v286
        %v325 = vpop.f32.mrf.mxu0
        %v326 = vadd.f32 %v306, %v325
        %327 = vmatmul.f32.gmra.mxu0 %v287
        %v328 = vpop.f32.mrf.mxu0
        %v329 = vadd.f32 %v306, %v328
        %330 = vdwg.mxu0
        %vm331 = vcmask 64512
        %332 = vst.msk [vmem:[%s226] sm:$0xff] %vm331, %v326
        %333 = vst.msk [vmem:[%s226 + $0x8] sm:$0xff] %vm331, %v329
        %s334 = sand.u32 %s134, 1
        %s335 = sand.u32 %s134, 1
        %s336 = smul.addr %s335, 16
        %s337 = scalar_lea.vmem [#allocation2], %s336
        // Predicated region
        $region41: #{tpu_custom_call.1} parent=39 // pred_check
          %p338 = pneg %p144
        $region42: #{tpu_custom_call.1} parent=39 // pred_check_branch
          %340 = sbr.rel (%p338) target = $region44
        $region43: #{tpu_custom_call.1} parent=39 // pred_region
          %s341 = smul.u32 2, %s16
          %s342 = ssub.s32 3, %s341
          %p343 = scmp.lt.s32.totalorder %s342, 2
          %s344 = scalar_select %p343, %s342, 2
          %s345 = smul.u32 8, %s344
          %p346 = scmp.ne.s32.totalorder 0, %s345
          %s347 = smul.addr %s341, 8
          %s348 = scalar_lea.vmem %s5, %s347
          // Predicated region
          $region45: #{tpu_custom_call.1} parent=43 // pred_check
            %p349 = pneg %p346
          $region46: #{tpu_custom_call.1} parent=43 // pred_check_branch
            %351 = sbr.rel (%p349) target = $region48
          $region47: #{tpu_custom_call.1} parent=43 // pred_region
            // Predicated region
            $region49: #{tpu_custom_call.1} parent=47 // pred_check
              _
            $region50: #{tpu_custom_call.1} parent=47 // pred_check_branch
              %353 = sbr.rel (0) target = $region52
            $region51: #{tpu_custom_call.1} parent=47 // pred_region
              // Predicated region
              $region71: #{tpu_custom_call.1} parent=51 // pred_check
                _
              $region72: #{tpu_custom_call.1} parent=51 // pred_check_branch
                %405 = sbr.rel (0) target = $region74
              $region73: #{tpu_custom_call.1} parent=51 // pred_region
                %s406 = sshrl.u32 %s344, 1
                // While loop
                $region75: #{tpu_custom_call.1} parent=73 // loop_pre_header
                  _
                $region76: #{tpu_custom_call.1} parent=73 // loop_header
                  %s408 = sphi 0, %s410
                  %p409 = scmp.ge.s32.totalorder %s408, %s406
                  %s413 = sphi 0, %s422
                  %s414 = sphi %s337, %s425
                  %s415 = sphi %s348, %s426
                $region77: #{tpu_custom_call.1} parent=73 // loop_header_branch
                  %412 = sbr.rel (%p409) target = $region81
                $region78: #{tpu_custom_call.1} parent=73 // loop_body
                  %v416 = vld [vmem:[%s414] sm:$0xff]
                  %417 = vst [vmem:[%s415] sm:$0xff] %v416
                  %v418 = vld [vmem:[%s414 + $0x8] sm:$0xff]
                  %419 = vst [vmem:[%s415 + $0x8] sm:$0xff] %v418
                  %s420 = sadd.s32 1, %s413
                  %p421 = scmp.ge.s32.totalorder %s420, %s406
                  %s422 = scalar_select %p421, 0, %s420
                  %s423 = smul.u32 %s422, 16
                  %s424 = smul.u32 %s422, 16
                  %s425 = scalar_lea.vmem %s337, %s423 [#allocation2]
                  %s426 = scalar_lea.vmem %s348, %s424
                $region79: #{tpu_custom_call.1} parent=73 // loop_footer
                  %s410 = sadd.s32 %s408, 1
                $region80: #{tpu_custom_call.1} parent=73 // loop_footer_branch
                  %407 = sbr.rel target = $region76
                $region81: #{tpu_custom_call.1} parent=73 // loop_exit
                  _
                %s427 = sshrl.u32 %s344, 1
                %s428 = sand.u32 %s344, 1
                %s429 = smul.u32 %s427, 2
                %s430 = smul.u32 8, %s429
                %s431 = scalar_lea.vmem %s337, %s430 [#allocation2]
                %s432 = smul.u32 8, %s429
                %s433 = scalar_lea.vmem %s348, %s432
                // While loop
                $region82: #{tpu_custom_call.1} parent=73 // loop_pre_header
                  _
                $region83: #{tpu_custom_call.1} parent=73 // loop_header
                  %s435 = sphi 0, %s437
                  %p436 = scmp.ge.s32.totalorder %s435, %s428
                  %s440 = sphi 0, %s447
                  %s441 = sphi %s431, %s450
                  %s442 = sphi %s433, %s451
                $region84: #{tpu_custom_call.1} parent=73 // loop_header_branch
                  %439 = sbr.rel (%p436) target = $region88
                $region85: #{tpu_custom_call.1} parent=73 // loop_body
                  %v443 = vld [vmem:[%s441] sm:$0xff]
                  %444 = vst [vmem:[%s442] sm:$0xff] %v443
                  %s445 = sadd.s32 1, %s440
                  %p446 = scmp.ge.s32.totalorder %s445, %s428
                  %s447 = scalar_select %p446, 0, %s445
                  %s448 = smul.u32 %s447, 8
                  %s449 = smul.u32 %s447, 8
                  %s450 = scalar_lea.vmem %s431, %s448 [#allocation2]
                  %s451 = scalar_lea.vmem %s433, %s449
                $region86: #{tpu_custom_call.1} parent=73 // loop_footer
                  %s437 = sadd.s32 %s435, 1
                $region87: #{tpu_custom_call.1} parent=73 // loop_footer_branch
                  %434 = sbr.rel target = $region83
                $region88: #{tpu_custom_call.1} parent=73 // loop_exit
                  _
              $region74: #{tpu_custom_call.1} parent=51 // pred_fallthru
                _
              // Predicated region
              $region89: #{tpu_custom_call.1} parent=51 // pred_check
                _
              $region90: #{tpu_custom_call.1} parent=51 // pred_check_branch
                %453 = sbr.rel target = $region92
              $region91: #{tpu_custom_call.1} parent=51 // pred_region
                _
              $region92: #{tpu_custom_call.1} parent=51 // pred_fallthru
                _
            $region52: #{tpu_custom_call.1} parent=47 // pred_fallthru
              _
            // Predicated region
            $region53: #{tpu_custom_call.1} parent=47 // pred_check
              _
            $region54: #{tpu_custom_call.1} parent=47 // pred_check_branch
              %355 = sbr.rel target = $region56
            $region55: #{tpu_custom_call.1} parent=47 // pred_region
              %s357 = ssub.s32 256, 1
              %s358 = sshrl.u32 %s344, 1
              // While loop
              $region57: #{tpu_custom_call.1} parent=55 // loop_pre_header
                _
              $region58: #{tpu_custom_call.1} parent=55 // loop_header
                %s360 = sphi 0, %s362
                %p361 = scmp.ge.s32.totalorder %s360, %s358
                %s365 = sphi 0, %s374
                %s366 = sphi %s337, %s377
                %s367 = sphi %s348, %s378
              $region59: #{tpu_custom_call.1} parent=55 // loop_header_branch
                %364 = sbr.rel (%p361) target = $region63
              $region60: #{tpu_custom_call.1} parent=55 // loop_body
                %v368 = vld [vmem:[%s366] sm:%s357]
                %369 = vst [vmem:[%s367] sm:%s357] %v368
                %v370 = vld [vmem:[%s366 + $0x8] sm:%s357]
                %371 = vst [vmem:[%s367 + $0x8] sm:%s357] %v370
                %s372 = sadd.s32 1, %s365
                %p373 = scmp.ge.s32.totalorder %s372, %s358
                %s374 = scalar_select %p373, 0, %s372
                %s375 = smul.u32 %s374, 16
                %s376 = smul.u32 %s374, 16
                %s377 = scalar_lea.vmem %s337, %s375 [#allocation2]
                %s378 = scalar_lea.vmem %s348, %s376
              $region61: #{tpu_custom_call.1} parent=55 // loop_footer
                %s362 = sadd.s32 %s360, 1
              $region62: #{tpu_custom_call.1} parent=55 // loop_footer_branch
                %359 = sbr.rel target = $region58
              $region63: #{tpu_custom_call.1} parent=55 // loop_exit
                _
              %s379 = sshrl.u32 %s344, 1
              %s380 = sand.u32 %s344, 1
              %s381 = smul.u32 %s379, 2
              %s382 = smul.u32 8, %s381
              %s383 = scalar_lea.vmem %s337, %s382 [#allocation2]
              %s384 = smul.u32 8, %s381
              %s385 = scalar_lea.vmem %s348, %s384
              // While loop
              $region64: #{tpu_custom_call.1} parent=55 // loop_pre_header
                _
              $region65: #{tpu_custom_call.1} parent=55 // loop_header
                %s387 = sphi 0, %s389
                %p388 = scmp.ge.s32.totalorder %s387, %s380
                %s392 = sphi 0, %s399
                %s393 = sphi %s383, %s402
                %s394 = sphi %s385, %s403
              $region66: #{tpu_custom_call.1} parent=55 // loop_header_branch
                %391 = sbr.rel (%p388) target = $region70
              $region67: #{tpu_custom_call.1} parent=55 // loop_body
                %v395 = vld [vmem:[%s393] sm:%s357]
                %396 = vst [vmem:[%s394] sm:%s357] %v395
                %s397 = sadd.s32 1, %s392
                %p398 = scmp.ge.s32.totalorder %s397, %s380
                %s399 = scalar_select %p398, 0, %s397
                %s400 = smul.u32 %s399, 8
                %s401 = smul.u32 %s399, 8
                %s402 = scalar_lea.vmem %s383, %s400 [#allocation2]
                %s403 = scalar_lea.vmem %s385, %s401
              $region68: #{tpu_custom_call.1} parent=55 // loop_footer
                %s389 = sadd.s32 %s387, 1
              $region69: #{tpu_custom_call.1} parent=55 // loop_footer_branch
                %386 = sbr.rel target = $region65
              $region70: #{tpu_custom_call.1} parent=55 // loop_exit
                _
            $region56: #{tpu_custom_call.1} parent=47 // pred_fallthru
              _
          $region48: #{tpu_custom_call.1} parent=43 // pred_fallthru
            _
          %454 = vnop
        $region44: #{tpu_custom_call.1} parent=39 // pred_fallthru
          _
      $region40: #{tpu_custom_call.1} parent=5 // pred_fallthru
        _
      %p455 = scmp.le.s32.totalorder 2, %s11
      // Predicated region
      $region93: #{tpu_custom_call.1} parent=5 // pred_check
        %p456 = pneg %p455
      $region94: #{tpu_custom_call.1} parent=5 // pred_check_branch
        %458 = sbr.rel (%p456) target = $region96
      $region95: #{tpu_custom_call.1} parent=5 // pred_region
        %s459 = ssub.s32 %s11, 2
        // Predicated region
        $region97: #{tpu_custom_call.1} parent=95 // pred_check
          %p460 = pneg %p150
        $region98: #{tpu_custom_call.1} parent=95 // pred_check_branch
          %462 = sbr.rel (%p460) target = $region100
        $region99: #{tpu_custom_call.1} parent=95 // pred_region
          %s463 = sand.u32 %s135, 1
          %s464 = sand.u32 %s135, 1
          %s465 = smul.addr %s464, 16
          %s466 = scalar_lea.vmem [#allocation2], %s465
        $region100: #{tpu_custom_call.1} parent=95 // pred_fallthru
          _
      $region96: #{tpu_custom_call.1} parent=5 // pred_fallthru
        _
    $region6: #{tpu_custom_call.1} parent=1 // loop_footer
      %s15 = sadd.s32 1, %s11
    $region7: #{tpu_custom_call.1} parent=1 // loop_footer_branch
      %10 = sbr.rel target = $region3
    $region8: #{tpu_custom_call.1} parent=1 // loop_exit
      _

</llo_original>
